<compile_context>
chip_gen: v5e
topology: v5e:2x2
jax: 0.10.0
libtpu: 0.0.40
codegen_flags: <defaults>
</compile_context>

<pallas_src>
import jax
import jax.numpy as jnp
from jax.experimental import pallas as pl
from jax.experimental.pallas import tpu as pltpu


def _round_up(n, m):
    return ((n + m - 1) // m) * m


def decoder_kernel(x_ref, w1_ref, b1_ref, w2_ref, b2_ref, out_ref):
    # Hidden layer: ReLU(x @ W1 + b1). MXU matmul in bf16, f32 accumulate.
    x = x_ref[...]
    h = jnp.dot(x.astype(jnp.bfloat16), w1_ref[...],
                preferred_element_type=jnp.float32)
    h = jnp.maximum(h + b1_ref[...], 0.0)            # f32 bias + ReLU on VPU

    # Output layer: Sigmoid(h @ W2 + b2). Cast activations to bf16 only for MXU.
    y = jnp.dot(h.astype(jnp.bfloat16), w2_ref[...],
                preferred_element_type=jnp.float32)
    y = y + b2_ref[...]
    # sigmoid(z) = 0.5 * tanh(0.5 * z) + 0.5  -> single EUP op + cheap VALU fma
    y = 0.5 * jnp.tanh(0.5 * y) + 0.5
    out_ref[...] = y.astype(out_ref.dtype)


def pad_and_cast_params(w1, b1, w2, b2, *, lane=128, compute_dtype=jnp.bfloat16):
    """Zero-pad hidden/output feature dims to multiples of 128 and cast the
    matmul weights to bf16 (biases stay f32). Zero padding guarantees padded
    hidden lanes are ReLU(0)=0 and contribute nothing to the second matmul.
    Note: the contraction dims (latent=16, hidden->128) are NOT padded further
    up to 256 -- the MXU is nowhere near binding at these sizes."""
    L, H = w1.shape
    _, O = w2.shape
    Hp = _round_up(H, lane)
    Op = _round_up(O, lane)
    w1p = jnp.zeros((L, Hp), compute_dtype).at[:, :H].set(w1.astype(compute_dtype))
    b1p = jnp.zeros((1, Hp), jnp.float32).at[:, :H].set(b1.astype(jnp.float32))
    w2p = jnp.zeros((Hp, Op), compute_dtype).at[:H, :O].set(w2.astype(compute_dtype))
    b2p = jnp.zeros((1, Op), jnp.float32).at[:, :O].set(b2.astype(jnp.float32))
    return w1p, b1p, w2p, b2p


def _choose_block_b(batch, requested):
    """Pick a batch tile: multiple of 8 sublanes, as large as requested/batch
    allows, but keep the grid >= 2 steps (when batch permits) so v7x's two
    TensorCores both get work on the 'parallel' batch axis."""
    bp8 = _round_up(batch, 8)
    tb = max(8, min(_round_up(requested, 8), bp8))
    if bp8 > 8 and pl.cdiv(bp8, tb) < 2:
        tb = _round_up(pl.cdiv(bp8, 2), 8)
    bp = _round_up(bp8, tb)
    return tb, bp


def decoder_forward(x, w1p, b1p, w2p, b2p, *, output_dim=None, block_b=1024,
                    out_dtype=jnp.bfloat16, trim_output=True):
    """x: (B, latent) f32; w1p: (latent, Hp) bf16; b1p: (1, Hp) f32;
       w2p: (Hp, Op) bf16; b2p: (1, Op) f32.

    If trim_output=False (recommended for performance), returns the padded
    (Bp, Op) array; valid data is out[:B, :output_dim] and the consumer must
    ignore the padding (padded columns are sigmoid(0)=0.5). If True, returns
    the trimmed (B, output_dim) array (extra XLA copy of the output stream)."""
    B, L = x.shape
    Hp = w1p.shape[1]
    Op = w2p.shape[1]
    if output_dim is None:
        output_dim = Op

    tb, Bp = _choose_block_b(B, block_b)
    if Bp != B:
        x = jnp.pad(x, ((0, Bp - B), (0, 0)))
    grid = (Bp // tb,)

    itemsize = lambda a: a.size * a.dtype.itemsize
    out_itemsize = jnp.dtype(out_dtype).itemsize
    cost = pl.CostEstimate(
        flops=2 * Bp * (L * Hp + Hp * Op),
        transcendentals=Bp * Op,  # one tanh per output element
        bytes_accessed=(itemsize(x) + itemsize(w1p) + itemsize(b1p)
                        + itemsize(w2p) + itemsize(b2p)
                        + Bp * Op * out_itemsize),
    )

    vmem = pltpu.MemorySpace.VMEM
    out = pl.pallas_call(
        decoder_kernel,
        out_shape=jax.ShapeDtypeStruct((Bp, Op), out_dtype),
        grid_spec=pltpu.PrefetchScalarGridSpec(
            num_scalar_prefetch=0,
            grid=grid,
            in_specs=[
                pl.BlockSpec((tb, L), lambda i: (i, 0), memory_space=vmem),
                pl.BlockSpec((L, Hp), lambda i: (0, 0), memory_space=vmem),   # resident
                pl.BlockSpec((1, Hp), lambda i: (0, 0), memory_space=vmem),   # resident
                pl.BlockSpec((Hp, Op), lambda i: (0, 0), memory_space=vmem),  # resident
                pl.BlockSpec((1, Op), lambda i: (0, 0), memory_space=vmem),   # resident
            ],
            out_specs=pl.BlockSpec((tb, Op), lambda i: (i, 0),
                                   memory_space=vmem),
        ),
        compiler_params=pltpu.CompilerParams(
            dimension_semantics=("parallel",),      # shard batch tiles over TCs
            vmem_limit_bytes=32 * 1024 * 1024,      # explicit headroom for larger tiles/dims
        ),
        cost_estimate=cost,
    )(x, w1p, b1p, w2p, b2p)

    if trim_output:
        out = out[:B, :output_dim]
    return out


def init_decoder_params(key, latent_dim, hidden_dim, output_dim, dtype=jnp.float32):
    """Deterministic synthetic init (PyTorch Linear-style uniform bounds).
    Weights are returned pre-transposed to (in, out)."""
    k1, k2, k3, k4 = jax.random.split(key, 4)
    bound1 = 1.0 / jnp.sqrt(latent_dim)
    bound2 = 1.0 / jnp.sqrt(hidden_dim)
    w1 = jax.random.uniform(k1, (latent_dim, hidden_dim), dtype, -bound1, bound1)
    b1 = jax.random.uniform(k2, (1, hidden_dim), dtype, -bound1, bound1)
    w2 = jax.random.uniform(k3, (hidden_dim, output_dim), dtype, -bound2, bound2)
    b2 = jax.random.uniform(k4, (1, output_dim), dtype, -bound2, bound2)
    return w1, b1, w2, b2


if __name__ == "__main__":
    latent_dim, hidden_dim, output_dim = 16, 32, 64
    batch = 256  # enough rows to exercise batch tiling (tile=128 -> grid=(2,))

    key = jax.random.PRNGKey(0)
    kx, kp = jax.random.split(key)
    x = jax.random.normal(kx, (batch, latent_dim), jnp.float32)
    w1, b1, w2, b2 = init_decoder_params(kp, latent_dim, hidden_dim, output_dim)
    w1p, b1p, w2p, b2p = pad_and_cast_params(w1, b1, w2, b2)

    # Performance path: no post-kernel slice copy, bf16 output; the consumer
    # (here: the correctness check) views only the valid region.
    out_padded = decoder_forward(x, w1p, b1p, w2p, b2p,
                                 output_dim=output_dim, block_b=1024,
                                 out_dtype=jnp.bfloat16, trim_output=False)
    jax.block_until_ready(out_padded)
    out = out_padded[:batch, :output_dim].astype(jnp.float32)

    # Reference in plain JAX (same math as the PyTorch forward, f32 weights).
    # Kernel uses bf16 matmul operands + bf16 output, so allow ~1e-2 tolerance
    # (outputs are in (0, 1)).
    h_ref = jnp.maximum(x @ w1 + b1, 0.0)
    ref = jax.nn.sigmoid(h_ref @ w2 + b2)
    assert out.shape == (batch, output_dim)
    err = float(jnp.max(jnp.abs(out - ref)))
    assert jnp.allclose(out, ref, atol=3e-2, rtol=3e-2), err

    print("KERNEL_OK")
</pallas_src>

<mosaic_0001>
module attributes {stable_mosaic.version = 11 : i64} {
  func.func @decoder_kernel(%arg0: i32, %arg1: memref<128x16xf32, #tpu.memory_space<vmem>>, %arg2: memref<16x128xbf16, #tpu.memory_space<vmem>>, %arg3: memref<1x128xf32, #tpu.memory_space<vmem>>, %arg4: memref<128x128xbf16, #tpu.memory_space<vmem>>, %arg5: memref<1x128xf32, #tpu.memory_space<vmem>>, %arg6: memref<128x128xbf16, #tpu.memory_space<vmem>>) attributes {dimension_semantics = [#tpu.dimension_semantics<parallel>], iteration_bounds = array<i64: 2>, scalar_prefetch = 0 : i64, scratch_operands = 0 : i64, tpu.core_type = #tpu.core_type<tc>, window_params = [{transform_indices = @transform_0, window_bounds = array<i64: 128, 16>}, {pipeline_mode = #tpu.pipeline_mode<synchronous>, transform_indices = @transform_1, window_bounds = array<i64: 16, 128>}, {pipeline_mode = #tpu.pipeline_mode<synchronous>, transform_indices = @transform_2, window_bounds = array<i64: 1, 128>}, {pipeline_mode = #tpu.pipeline_mode<synchronous>, transform_indices = @transform_3, window_bounds = array<i64: 128, 128>}, {pipeline_mode = #tpu.pipeline_mode<synchronous>, transform_indices = @transform_4, window_bounds = array<i64: 1, 128>}, {transform_indices = @transform_5, window_bounds = array<i64: 128, 128>}]} {
    %c0 = arith.constant 0 : index
    %c0_0 = arith.constant 0 : index
    %0 = vector.load %arg1[%c0, %c0_0] : memref<128x16xf32, #tpu.memory_space<vmem>>, vector<128x16xf32>
    %1 = arith.truncf %0 : vector<128x16xf32> to vector<128x16xbf16>
    %c0_1 = arith.constant 0 : index
    %c0_2 = arith.constant 0 : index
    %2 = vector.load %arg2[%c0_1, %c0_2] : memref<16x128xbf16, #tpu.memory_space<vmem>>, vector<16x128xbf16>
    %cst = arith.constant dense<0.000000e+00> : vector<128x128xf32>
    %3 = tpu.matmul %1, %2, %cst {dimension_numbers = #tpu.dot_dimension_numbers<[1], [0], [0], [1], [0, 0, 1, 1], [], []>} : vector<128x16xbf16>, vector<16x128xbf16>, vector<128x128xf32> -> vector<128x128xf32>
    %c0_3 = arith.constant 0 : index
    %c0_4 = arith.constant 0 : index
    %4 = vector.load %arg3[%c0_3, %c0_4] : memref<1x128xf32, #tpu.memory_space<vmem>>, vector<1x128xf32>
    %5 = vector.broadcast %4 : vector<1x128xf32> to vector<128x128xf32>
    %6 = arith.addf %3, %5 : vector<128x128xf32>
    %cst_5 = arith.constant 0.000000e+00 : f32
    %7 = vector.broadcast %cst_5 : f32 to vector<128x128xf32>
    %8 = arith.maximumf %6, %7 : vector<128x128xf32>
    %9 = arith.truncf %8 : vector<128x128xf32> to vector<128x128xbf16>
    %c0_6 = arith.constant 0 : index
    %c0_7 = arith.constant 0 : index
    %10 = vector.load %arg4[%c0_6, %c0_7] : memref<128x128xbf16, #tpu.memory_space<vmem>>, vector<128x128xbf16>
    %cst_8 = arith.constant dense<0.000000e+00> : vector<128x128xf32>
    %11 = tpu.matmul %9, %10, %cst_8 {dimension_numbers = #tpu.dot_dimension_numbers<[1], [0], [0], [1], [0, 0, 1, 1], [], []>} : vector<128x128xbf16>, vector<128x128xbf16>, vector<128x128xf32> -> vector<128x128xf32>
    %c0_9 = arith.constant 0 : index
    %c0_10 = arith.constant 0 : index
    %12 = vector.load %arg5[%c0_9, %c0_10] : memref<1x128xf32, #tpu.memory_space<vmem>>, vector<1x128xf32>
    %13 = vector.broadcast %12 : vector<1x128xf32> to vector<128x128xf32>
    %14 = arith.addf %11, %13 : vector<128x128xf32>
    %cst_11 = arith.constant 5.000000e-01 : f32
    %15 = vector.broadcast %cst_11 : f32 to vector<128x128xf32>
    %16 = arith.mulf %15, %14 : vector<128x128xf32>
    %17 = math.tanh %16 : vector<128x128xf32>
    %cst_12 = arith.constant 5.000000e-01 : f32
    %18 = vector.broadcast %cst_12 : f32 to vector<128x128xf32>
    %19 = arith.mulf %18, %17 : vector<128x128xf32>
    %cst_13 = arith.constant 5.000000e-01 : f32
    %20 = vector.broadcast %cst_13 : f32 to vector<128x128xf32>
    %21 = arith.addf %19, %20 : vector<128x128xf32>
    %22 = arith.truncf %21 : vector<128x128xf32> to vector<128x128xbf16>
    %c0_14 = arith.constant 0 : index
    %c0_15 = arith.constant 0 : index
    %23 = vector.load %arg6[%c0_14, %c0_15] : memref<128x128xbf16, #tpu.memory_space<vmem>>, vector<128x128xbf16>
    tpu.vector_store %arg6[%c0_14, %c0_15], %22 {strides = array<i32>} : memref<128x128xbf16, #tpu.memory_space<vmem>>, vector<128x128xbf16>,
    return
  }
  func.func @transform_0(%arg0: i32) -> (i32, i32) {
    %c0_i32 = arith.constant 0 : i32
    %c0_i32_0 = arith.constant 0 : i32
    return %arg0, %c0_i32 : i32, i32
  }
  func.func @transform_1(%arg0: i32) -> (i32, i32) {
    %c0_i32 = arith.constant 0 : i32
    %c0_i32_0 = arith.constant 0 : i32
    %c0_i32_1 = arith.constant 0 : i32
    return %c0_i32, %c0_i32_0 : i32, i32
  }
  func.func @transform_2(%arg0: i32) -> (i32, i32) {
    %c0_i32 = arith.constant 0 : i32
    %c0_i32_0 = arith.constant 0 : i32
    %c0_i32_1 = arith.constant 0 : i32
    return %c0_i32, %c0_i32_0 : i32, i32
  }
  func.func @transform_3(%arg0: i32) -> (i32, i32) {
    %c0_i32 = arith.constant 0 : i32
    %c0_i32_0 = arith.constant 0 : i32
    %c0_i32_1 = arith.constant 0 : i32
    return %c0_i32, %c0_i32_0 : i32, i32
  }
  func.func @transform_4(%arg0: i32) -> (i32, i32) {
    %c0_i32 = arith.constant 0 : i32
    %c0_i32_0 = arith.constant 0 : i32
    %c0_i32_1 = arith.constant 0 : i32
    return %c0_i32, %c0_i32_0 : i32, i32
  }
  func.func @transform_5(%arg0: i32) -> (i32, i32) {
    %c0_i32 = arith.constant 0 : i32
    %c0_i32_0 = arith.constant 0 : i32
    return %arg0, %c0_i32 : i32, i32
  }
}

</mosaic_0001>

<llo_original>
// kernel: tpu_custom_call.1
$region0: #{tpu_custom_call.1}
  #allocation0 [shape = 'u32[]', space=smem, size = 0x4, offset = 0x4, fixed_abs, tag = 'smem constant byte address 0x4 - core index']
  #allocation1 [shape = 'u32[72,128]{1,0:T(1,128)}', space=vmem, size = 0x9000, scoped, tag = 'internal scratch']
  %s0 = inlined_call_operand.vmem [shape: f32[256,16], index: 0, kind: input, shape index: {}]
  %s1 = inlined_call_operand.vmem [shape: bf16[16,128], index: 1, kind: input, shape index: {}]
  %s2 = inlined_call_operand.vmem [shape: f32[1,128], index: 2, kind: input, shape index: {}]
  %s3 = inlined_call_operand.vmem [shape: bf16[128,128], index: 3, kind: input, shape index: {}]
  %s4 = inlined_call_operand.vmem [shape: f32[1,128], index: 4, kind: input, shape index: {}]
  %s5 = inlined_call_operand.hbm [shape: bf16[256,128], index: 5, kind: output, shape index: {}]
  %s6 = sld [smem:[#allocation0]]
  $region53: #{tpu_custom_call.1} parent=0
    _
  %s8 = ssub.s32 1, %s6
  %s9 = scalar_select 0, %s8, %s6
  $region1: #{tpu_custom_call.1} parent=0
    #allocation2 [shape = 'u8[65536]{0}', space=vmem, size = 0x10000, scoped, tag = 'output window, operand 0']
    #allocation3 [shape = 's32[2]{0}', space=sflag, size = 0x8, scoped, tag = 'scoped memory for tpu_custom_call.1']
    %10 = vsyncpa [#allocation3], 0
    %s11 = scalar_lea.sflag [#allocation3], 1
    %12 = vsyncpa %s11, 0
    loop: start=0, step=1, limit=4
    $region2: #{tpu_custom_call.1} parent=1 // loop_pre_header
      _
    $region3: #{tpu_custom_call.1} parent=1 // loop_header
      %s14 = sphi 0, %s18
      %p15 = scmp.ge.s32.totalorder %s14, 4
      %s24 = sphi 0, %s26
      %s27 = sphi 0, %s24
      %s28 = sphi 0, %s27
      %s44 = sphi 0, %s28
      %s48 = sphi 0, %s48
      %s50 = sphi 0, %s48
      %s51 = sphi 0, %s50
      %s65 = sphi 0, %s51
      %s69 = sphi 0, %s69
      %s71 = sphi 0, %s69
      %s72 = sphi 0, %s71
      %s86 = sphi 0, %s72
      %s90 = sphi 0, %s90
      %s92 = sphi 0, %s90
      %s93 = sphi 0, %s92
      %s107 = sphi 0, %s93
      %s111 = sphi 0, %s111
      %s113 = sphi 0, %s111
      %s114 = sphi 0, %s113
      %s128 = sphi 0, %s114
      %s134 = sphi 0, %s136
      %s137 = sphi 0, %s134
      %s138 = sphi 0, %s137
      %s154 = sphi 0, %s138
    $region4: #{tpu_custom_call.1} parent=1 // loop_header_branch
      %17 = sbr.rel (%p15) target = $region8
    $region5: #{tpu_custom_call.1} parent=1 // loop_body
      %s19 = ssub.s32 %s14, 1
      %s20 = ssub.s32 %s14, 2
      %s21 = sadd.s32 %s14, 1
      %s22 = ssub.s32 %s14, %s21
      %p23 = scmp.eq.s32.totalorder %s22, 0
      %s25 = sadd.s32 %s24, 1
      %s26 = scalar_select %p23, %s24, %s25
      %p29 = pneg %p23
      %p30 = scmp.eq.s32.totalorder %s14, 1
      %p31 = por %p29, %p30
      %p32 = scmp.ne.s32.totalorder %s24, %s27
      %p33 = scmp.eq.s32.totalorder %s14, 0
      %p34 = por %p32, %p33
      %p35 = scmp.ne.s32.totalorder %s24, %s27
      %p36 = scmp.eq.s32.totalorder %s19, 1
      %p37 = por %p35, %p36
      %p38 = scmp.ne.s32.totalorder %s27, %s28
      %p39 = scmp.eq.s32.totalorder %s19, 0
      %p40 = por %p38, %p39
      %p41 = scmp.ne.s32.totalorder %s27, %s28
      %p42 = scmp.eq.s32.totalorder %s20, 1
      %p43 = por %p41, %p42
      %p45 = scmp.ne.s32.totalorder %s28, %s44
      %p46 = scmp.eq.s32.totalorder %s20, 0
      %p47 = por %p45, %p46
      %s49 = sadd.s32 %s48, 1
      %p52 = scmp.eq.s32.totalorder %s14, 1
      %p53 = scmp.ne.s32.totalorder %s48, %s50
      %p54 = scmp.eq.s32.totalorder %s14, 0
      %p55 = por %p53, %p54
      %p56 = scmp.ne.s32.totalorder %s48, %s50
      %p57 = scmp.eq.s32.totalorder %s19, 1
      %p58 = por %p56, %p57
      %p59 = scmp.ne.s32.totalorder %s50, %s51
      %p60 = scmp.eq.s32.totalorder %s19, 0
      %p61 = por %p59, %p60
      %p62 = scmp.ne.s32.totalorder %s50, %s51
      %p63 = scmp.eq.s32.totalorder %s20, 1
      %p64 = por %p62, %p63
      %p66 = scmp.ne.s32.totalorder %s51, %s65
      %p67 = scmp.eq.s32.totalorder %s20, 0
      %p68 = por %p66, %p67
      %s70 = sadd.s32 %s69, 1
      %p73 = scmp.eq.s32.totalorder %s14, 1
      %p74 = scmp.ne.s32.totalorder %s69, %s71
      %p75 = scmp.eq.s32.totalorder %s14, 0
      %p76 = por %p74, %p75
      %p77 = scmp.ne.s32.totalorder %s69, %s71
      %p78 = scmp.eq.s32.totalorder %s19, 1
      %p79 = por %p77, %p78
      %p80 = scmp.ne.s32.totalorder %s71, %s72
      %p81 = scmp.eq.s32.totalorder %s19, 0
      %p82 = por %p80, %p81
      %p83 = scmp.ne.s32.totalorder %s71, %s72
      %p84 = scmp.eq.s32.totalorder %s20, 1
      %p85 = por %p83, %p84
      %p87 = scmp.ne.s32.totalorder %s72, %s86
      %p88 = scmp.eq.s32.totalorder %s20, 0
      %p89 = por %p87, %p88
      %s91 = sadd.s32 %s90, 1
      %p94 = scmp.eq.s32.totalorder %s14, 1
      %p95 = scmp.ne.s32.totalorder %s90, %s92
      %p96 = scmp.eq.s32.totalorder %s14, 0
      %p97 = por %p95, %p96
      %p98 = scmp.ne.s32.totalorder %s90, %s92
      %p99 = scmp.eq.s32.totalorder %s19, 1
      %p100 = por %p98, %p99
      %p101 = scmp.ne.s32.totalorder %s92, %s93
      %p102 = scmp.eq.s32.totalorder %s19, 0
      %p103 = por %p101, %p102
      %p104 = scmp.ne.s32.totalorder %s92, %s93
      %p105 = scmp.eq.s32.totalorder %s20, 1
      %p106 = por %p104, %p105
      %p108 = scmp.ne.s32.totalorder %s93, %s107
      %p109 = scmp.eq.s32.totalorder %s20, 0
      %p110 = por %p108, %p109
      %s112 = sadd.s32 %s111, 1
      %p115 = scmp.eq.s32.totalorder %s14, 1
      %p116 = scmp.ne.s32.totalorder %s111, %s113
      %p117 = scmp.eq.s32.totalorder %s14, 0
      %p118 = por %p116, %p117
      %p119 = scmp.ne.s32.totalorder %s111, %s113
      %p120 = scmp.eq.s32.totalorder %s19, 1
      %p121 = por %p119, %p120
      %p122 = scmp.ne.s32.totalorder %s113, %s114
      %p123 = scmp.eq.s32.totalorder %s19, 0
      %p124 = por %p122, %p123
      %p125 = scmp.ne.s32.totalorder %s113, %s114
      %p126 = scmp.eq.s32.totalorder %s20, 1
      %p127 = por %p125, %p126
      %p129 = scmp.ne.s32.totalorder %s114, %s128
      %p130 = scmp.eq.s32.totalorder %s20, 0
      %p131 = por %p129, %p130
      %s132 = ssub.s32 %s14, %s21
      %p133 = scmp.eq.s32.totalorder %s132, 0
      %s135 = sadd.s32 %s134, 1
      %s136 = scalar_select %p133, %s134, %s135
      %p139 = pneg %p133
      %p140 = scmp.eq.s32.totalorder %s14, 1
      %p141 = por %p139, %p140
      %p142 = scmp.ne.s32.totalorder %s134, %s137
      %p143 = scmp.eq.s32.totalorder %s14, 0
      %p144 = por %p142, %p143
      %p145 = scmp.ne.s32.totalorder %s134, %s137
      %p146 = scmp.eq.s32.totalorder %s19, 1
      %p147 = por %p145, %p146
      %p148 = scmp.ne.s32.totalorder %s137, %s138
      %p149 = scmp.eq.s32.totalorder %s19, 0
      %p150 = por %p148, %p149
      %p151 = scmp.ne.s32.totalorder %s137, %s138
      %p152 = scmp.eq.s32.totalorder %s20, 1
      %p153 = por %p151, %p152
      %p155 = scmp.ne.s32.totalorder %s138, %s154
      %p156 = scmp.eq.s32.totalorder %s20, 0
      %p157 = por %p155, %p156
      %p158 = scmp.le.s32.totalorder 1, %s14
      %p159 = scmp.lt.s32.totalorder %s14, 3
      %p160 = pnand %p158, %p159
      %p161 = pneg %p160
      // Predicated region
      $region9: #{tpu_custom_call.1} parent=5 // pred_check
        _
      $region10: #{tpu_custom_call.1} parent=5 // pred_check_branch
        %163 = sbr.rel (%p160) target = $region12
      $region11: #{tpu_custom_call.1} parent=5 // pred_region
        %s164 = ssub.s32 %s14, 1
        // Predicated region
        $region13: #{tpu_custom_call.1} parent=11 // pred_check
          %p165 = pneg %p61
        $region14: #{tpu_custom_call.1} parent=11 // pred_check_branch
          %167 = sbr.rel (%p165) target = $region16
        $region15: #{tpu_custom_call.1} parent=11 // pred_region
          _
        $region16: #{tpu_custom_call.1} parent=11 // pred_fallthru
          _
        // Predicated region
        $region17: #{tpu_custom_call.1} parent=11 // pred_check
          %p168 = pneg %p82
        $region18: #{tpu_custom_call.1} parent=11 // pred_check_branch
          %170 = sbr.rel (%p168) target = $region20
        $region19: #{tpu_custom_call.1} parent=11 // pred_region
          _
        $region20: #{tpu_custom_call.1} parent=11 // pred_fallthru
          _
        // Predicated region
        $region21: #{tpu_custom_call.1} parent=11 // pred_check
          %p171 = pneg %p103
        $region22: #{tpu_custom_call.1} parent=11 // pred_check_branch
          %173 = sbr.rel (%p171) target = $region24
        $region23: #{tpu_custom_call.1} parent=11 // pred_region
          _
        $region24: #{tpu_custom_call.1} parent=11 // pred_fallthru
          _
        // Predicated region
        $region25: #{tpu_custom_call.1} parent=11 // pred_check
          %p174 = pneg %p124
        $region26: #{tpu_custom_call.1} parent=11 // pred_check_branch
          %176 = sbr.rel (%p174) target = $region28
        $region27: #{tpu_custom_call.1} parent=11 // pred_region
          _
        $region28: #{tpu_custom_call.1} parent=11 // pred_fallthru
          _
      $region12: #{tpu_custom_call.1} parent=5 // pred_fallthru
        _
      %p177 = scmp.lt.s32.totalorder %s14, 2
      // Predicated region
      $region29: #{tpu_custom_call.1} parent=5 // pred_check
        %p178 = pneg %p177
      $region30: #{tpu_custom_call.1} parent=5 // pred_check_branch
        %180 = sbr.rel (%p178) target = $region32
      $region31: #{tpu_custom_call.1} parent=5 // pred_region
        // Predicated region
        $region33: #{tpu_custom_call.1} parent=31 // pred_check
          %p181 = pneg %p34
        $region34: #{tpu_custom_call.1} parent=31 // pred_check_branch
          %183 = sbr.rel (%p181) target = $region36
        $region35: #{tpu_custom_call.1} parent=31 // pred_region
          %s184 = smul.u32 16, %s14
          %p185 = scmp.lt.s32.totalorder %s184, 31
          %s186 = scalar_select %p185, %s184, 31
          %s187 = smul.addr %s186, 8
          %s188 = scalar_lea.vmem %s0, %s187
          %s189 = smul.u32 16, %s14
        $region36: #{tpu_custom_call.1} parent=31 // pred_fallthru
          _
      $region32: #{tpu_custom_call.1} parent=5 // pred_fallthru
        _
      %p190 = scmp.le.s32.totalorder 1, %s14
      %p191 = scmp.lt.s32.totalorder %s14, 3
      %p192 = pnand %p190, %p191
      %p193 = pneg %p192
      // Predicated region
      $region37: #{tpu_custom_call.1} parent=5 // pred_check
        _
      $region38: #{tpu_custom_call.1} parent=5 // pred_check_branch
        %195 = sbr.rel (%p192) target = $region40
      $region39: #{tpu_custom_call.1} parent=5 // pred_region
        %s196 = ssub.s32 %s14, 1
        %s197 = smul.u32 16, %s19
        %p198 = scmp.lt.s32.totalorder %s197, 31
        %s199 = scalar_select %p198, %s197, 31
        %s200 = smul.addr %s199, 8
        %s201 = scalar_lea.vmem %s0, %s200
        %p202 = pneg %p40
        %p203 = pneg %p37
        %p204 = pneg %p61
        %p205 = pneg %p58
        %p206 = pneg %p82
        %p207 = pneg %p79
        %p208 = pneg %p103
        %p209 = pneg %p100
        %p210 = pneg %p124
        %p211 = pneg %p121
        %p212 = pneg %p150
        %p213 = pneg %p147
        %s214 = sand.u32 %s137, 1
        %s215 = scalar_lea.sflag [#allocation3], %s214
        %s216 = sand.u32 %s137, 1
        %s217 = smul.addr %s216, 64
        %s218 = scalar_lea.vmem [#allocation2], %s217
        %s219 = smul.u32 16, %s19
        %p220 = scmp.lt.s32.totalorder %s219, 31
        %s221 = scalar_select %p220, %s219, 31
        %s222 = smul.addr %s221, 8
        %s223 = scalar_lea.vmem %s0, %s222
        %s224 = smul.u32 16, %s19
        %s225 = smul.u32 16, %s19
        %v227 = vld [vmem:[%s223] sm:$0xff]
        %v228 = vld [vmem:[%s223 + $0x8] sm:$0xff]
        %v229 = vld [vmem:[%s223 + $0x10] sm:$0xff]
        %v230 = vld [vmem:[%s223 + $0x18] sm:$0xff]
        %v231 = vld [vmem:[%s223 + $0x20] sm:$0xff]
        %v232 = vld [vmem:[%s223 + $0x28] sm:$0xff]
        %v233 = vld [vmem:[%s223 + $0x30] sm:$0xff]
        %v234 = vld [vmem:[%s223 + $0x38] sm:$0xff]
        %v235 = vld [vmem:[%s223 + $0x40] sm:$0xff]
        %v236 = vld [vmem:[%s223 + $0x48] sm:$0xff]
        %v237 = vld [vmem:[%s223 + $0x50] sm:$0xff]
        %v238 = vld [vmem:[%s223 + $0x58] sm:$0xff]
        %v239 = vld [vmem:[%s223 + $0x60] sm:$0xff]
        %v240 = vld [vmem:[%s223 + $0x68] sm:$0xff]
        %v241 = vld [vmem:[%s223 + $0x70] sm:$0xff]
        %v242 = vld [vmem:[%s223 + $0x78] sm:$0xff]
        %v243 = vpack.c.bf16 %v228, %v227
        %v244 = vpack.c.bf16 %v230, %v229
        %v245 = vpack.c.bf16 %v232, %v231
        %v246 = vpack.c.bf16 %v234, %v233
        %v247 = vpack.c.bf16 %v236, %v235
        %v248 = vpack.c.bf16 %v238, %v237
        %v249 = vpack.c.bf16 %v240, %v239
        %v250 = vpack.c.bf16 %v242, %v241
        %v251 = vld [vmem:[%s1] sm:$0xf]
        %v252 = vld [vmem:[%s1 + $0x4] sm:$0xf]
        %v253 = vld [vmem:[%s2] sm:$0x1]
        %v255 = vperm.slane %v253, 0
        %v259 = vunpack.c.l.b16 %v251
        %v260 = vunpack.c.l.b16 %v252
        %v261 = vpack.c.b16 %v260, %v259
        %vm263 = vcmask 130048
        %v265 = vsel %vm263, %v243, 0
        %v268 = vsel %vm263, %v244, 0
        %v271 = vsel %vm263, %v245, 0
        %v274 = vsel %vm263, %v246, 0
        %v277 = vsel %vm263, %v247, 0
        %v280 = vsel %vm263, %v248, 0
        %v283 = vsel %vm263, %v249, 0
        %v286 = vsel %vm263, %v250, 0
        %288 = vmatpush.bf16.msra.mxu0 0
        %289 = vmatpush.bf16.msra.mxu0 0
        %290 = vmatpush.bf16.msra.mxu0 0
        %291 = vmatpush.bf16.msra.mxu0 0
        %292 = vmatpush.bf16.msra.mxu0 0
        %293 = vmatpush.bf16.msra.mxu0 0
        %294 = vmatpush.bf16.msra.mxu0 0
        %295 = vmatpush.bf16.msra.mxu0 %v261
        %296 = vmatmul.bf16.gmra.mxu0 %v265
        %v297 = vpop.f32.mrf.mxu0
        %v298 = vadd.f32 %v255, %v297
        %v299 = vpop.f32.mrf.mxu0
        %v300 = vadd.f32 %v255, %v299
        %301 = vmatmul.bf16.gmra.mxu0 %v268
        %v302 = vpop.f32.mrf.mxu0
        %v303 = vadd.f32 %v255, %v302
        %v304 = vpop.f32.mrf.mxu0
        %v305 = vadd.f32 %v255, %v304
        %306 = vmatmul.bf16.gmra.mxu0 %v271
        %v307 = vpop.f32.mrf.mxu0
        %v308 = vadd.f32 %v255, %v307
        %v309 = vpop.f32.mrf.mxu0
        %v310 = vadd.f32 %v255, %v309
        %311 = vmatmul.bf16.gmra.mxu0 %v274
        %v312 = vpop.f32.mrf.mxu0
        %v313 = vadd.f32 %v255, %v312
        %v314 = vpop.f32.mrf.mxu0
        %v315 = vadd.f32 %v255, %v314
        %316 = vmatmul.bf16.gmra.mxu0 %v277
        %v317 = vpop.f32.mrf.mxu0
        %v318 = vadd.f32 %v255, %v317
        %v319 = vpop.f32.mrf.mxu0
        %v320 = vadd.f32 %v255, %v319
        %321 = vmatmul.bf16.gmra.mxu0 %v280
        %v322 = vpop.f32.mrf.mxu0
        %v323 = vadd.f32 %v255, %v322
        %v324 = vpop.f32.mrf.mxu0
        %v325 = vadd.f32 %v255, %v324
        %326 = vmatmul.bf16.gmra.mxu0 %v283
        %v327 = vpop.f32.mrf.mxu0
        %v328 = vadd.f32 %v255, %v327
        %v329 = vpop.f32.mrf.mxu0
        %v330 = vadd.f32 %v255, %v329
        %331 = vmatmul.bf16.gmra.mxu0 %v286
        %v332 = vpop.f32.mrf.mxu0
        %v333 = vadd.f32 %v255, %v332
        %v334 = vpop.f32.mrf.mxu0
        %v335 = vadd.f32 %v255, %v334
        %336 = vdwg.mxu0
        %v337 = vmax.f32 %v298, 0.0
        %v338 = vmax.f32 %v300, 0.0
        %v339 = vmax.f32 %v303, 0.0
        %v340 = vmax.f32 %v305, 0.0
        %v341 = vmax.f32 %v308, 0.0
        %v342 = vmax.f32 %v310, 0.0
        %v343 = vmax.f32 %v313, 0.0
        %v344 = vmax.f32 %v315, 0.0
        %v345 = vmax.f32 %v318, 0.0
        %v346 = vmax.f32 %v320, 0.0
        %v347 = vmax.f32 %v323, 0.0
        %v348 = vmax.f32 %v325, 0.0
        %v349 = vmax.f32 %v328, 0.0
        %v350 = vmax.f32 %v330, 0.0
        %v351 = vmax.f32 %v333, 0.0
        %v352 = vmax.f32 %v335, 0.0
        %v353 = vpack.c.bf16 %v338, %v337
        %v354 = vpack.c.bf16 %v340, %v339
        %v355 = vpack.c.bf16 %v342, %v341
        %v356 = vpack.c.bf16 %v344, %v343
        %v357 = vpack.c.bf16 %v346, %v345
        %v358 = vpack.c.bf16 %v348, %v347
        %v359 = vpack.c.bf16 %v350, %v349
        %v360 = vpack.c.bf16 %v352, %v351
        %v361 = vld [vmem:[%s3] sm:$0xf]
        %v362 = vld [vmem:[%s3 + $0x4] sm:$0xf]
        %v363 = vld [vmem:[%s3 + $0x8] sm:$0xf]
        %v364 = vld [vmem:[%s3 + $0xc] sm:$0xf]
        %v365 = vld [vmem:[%s3 + $0x10] sm:$0xf]
        %v366 = vld [vmem:[%s3 + $0x14] sm:$0xf]
        %v367 = vld [vmem:[%s3 + $0x18] sm:$0xf]
        %v368 = vld [vmem:[%s3 + $0x1c] sm:$0xf]
        %v369 = vld [vmem:[%s3 + $0x20] sm:$0xf]
        %v370 = vld [vmem:[%s3 + $0x24] sm:$0xf]
        %v371 = vld [vmem:[%s3 + $0x28] sm:$0xf]
        %v372 = vld [vmem:[%s3 + $0x2c] sm:$0xf]
        %v373 = vld [vmem:[%s3 + $0x30] sm:$0xf]
        %v374 = vld [vmem:[%s3 + $0x34] sm:$0xf]
        %v375 = vld [vmem:[%s3 + $0x38] sm:$0xf]
        %v376 = vld [vmem:[%s3 + $0x3c] sm:$0xf]
        %v377 = vld [vmem:[%s4] sm:$0x1]
        %v379 = vperm.slane %v377, 0
        %v397 = vunpack.c.l.b16 %v361
        %v398 = vunpack.c.l.b16 %v362
        %v399 = vunpack.c.l.b16 %v363
        %v400 = vunpack.c.l.b16 %v364
        %v401 = vunpack.c.l.b16 %v365
        %v402 = vunpack.c.l.b16 %v366
        %v403 = vunpack.c.l.b16 %v367
        %v404 = vunpack.c.l.b16 %v368
        %v405 = vunpack.c.l.b16 %v369
        %v406 = vunpack.c.l.b16 %v370
        %v407 = vunpack.c.l.b16 %v371
        %v408 = vunpack.c.l.b16 %v372
        %v409 = vunpack.c.l.b16 %v373
        %v410 = vunpack.c.l.b16 %v374
        %v411 = vunpack.c.l.b16 %v375
        %v412 = vunpack.c.l.b16 %v376
        %v413 = vpack.c.b16 %v398, %v397
        %v414 = vpack.c.b16 %v400, %v399
        %v415 = vpack.c.b16 %v402, %v401
        %v416 = vpack.c.b16 %v404, %v403
        %v417 = vpack.c.b16 %v406, %v405
        %v418 = vpack.c.b16 %v408, %v407
        %v419 = vpack.c.b16 %v410, %v409
        %v420 = vpack.c.b16 %v412, %v411
        %429 = vmatpush.bf16.msra.mxu0 %v420
        %430 = vmatpush.bf16.msra.mxu0 %v419
        %431 = vmatpush.bf16.msra.mxu0 %v418
        %432 = vmatpush.bf16.msra.mxu0 %v417
        %433 = vmatpush.bf16.msra.mxu0 %v416
        %434 = vmatpush.bf16.msra.mxu0 %v415
        %435 = vmatpush.bf16.msra.mxu0 %v414
        %436 = vmatpush.bf16.msra.mxu0 %v413
        %437 = vmatmul.bf16.gmra.mxu0 %v353
        %v438 = vpop.f32.mrf.mxu0
        %v439 = vadd.f32 %v379, %v438
        %v440 = vpop.f32.mrf.mxu0
        %v441 = vadd.f32 %v379, %v440
        %442 = vmatmul.bf16.gmra.mxu0 %v354
        %v443 = vpop.f32.mrf.mxu0
        %v444 = vadd.f32 %v379, %v443
        %v445 = vpop.f32.mrf.mxu0
        %v446 = vadd.f32 %v379, %v445
        %447 = vmatmul.bf16.gmra.mxu0 %v355
        %v448 = vpop.f32.mrf.mxu0
        %v449 = vadd.f32 %v379, %v448
        %v450 = vpop.f32.mrf.mxu0
        %v451 = vadd.f32 %v379, %v450
        %452 = vmatmul.bf16.gmra.mxu0 %v356
        %v453 = vpop.f32.mrf.mxu0
        %v454 = vadd.f32 %v379, %v453
        %v455 = vpop.f32.mrf.mxu0
        %v456 = vadd.f32 %v379, %v455
        %457 = vmatmul.bf16.gmra.mxu0 %v357
        %v458 = vpop.f32.mrf.mxu0
        %v459 = vadd.f32 %v379, %v458
        %v460 = vpop.f32.mrf.mxu0
        %v461 = vadd.f32 %v379, %v460
        %462 = vmatmul.bf16.gmra.mxu0 %v358
        %v463 = vpop.f32.mrf.mxu0
        %v464 = vadd.f32 %v379, %v463
        %v465 = vpop.f32.mrf.mxu0
        %v466 = vadd.f32 %v379, %v465
        %467 = vmatmul.bf16.gmra.mxu0 %v359
        %v468 = vpop.f32.mrf.mxu0
        %v469 = vadd.f32 %v379, %v468
        %v470 = vpop.f32.mrf.mxu0
        %v471 = vadd.f32 %v379, %v470
        %472 = vmatmul.bf16.gmra.mxu0 %v360
        %v473 = vpop.f32.mrf.mxu0
        %v474 = vadd.f32 %v379, %v473
        %v475 = vpop.f32.mrf.mxu0
        %v476 = vadd.f32 %v379, %v475
        %477 = vdwg.mxu0
        %v478 = vmul.f32 %v439, 0.5
        %v479 = vmul.f32 %v441, 0.5
        %v480 = vmul.f32 %v444, 0.5
        %v481 = vmul.f32 %v446, 0.5
        %v482 = vmul.f32 %v449, 0.5
        %v483 = vmul.f32 %v451, 0.5
        %v484 = vmul.f32 %v454, 0.5
        %v485 = vmul.f32 %v456, 0.5
        %v486 = vmul.f32 %v459, 0.5
        %v487 = vmul.f32 %v461, 0.5
        %v488 = vmul.f32 %v464, 0.5
        %v489 = vmul.f32 %v466, 0.5
        %v490 = vmul.f32 %v469, 0.5
        %v491 = vmul.f32 %v471, 0.5
        %v492 = vmul.f32 %v474, 0.5
        %v493 = vmul.f32 %v476, 0.5
        %v494 = vtanh.pop %v478
        %v495 = vtanh.pop %v479
        %v496 = vtanh.pop %v480
        %v497 = vtanh.pop %v481
        %v498 = vtanh.pop %v482
        %v499 = vtanh.pop %v483
        %v500 = vtanh.pop %v484
        %v501 = vtanh.pop %v485
        %v502 = vtanh.pop %v486
        %v503 = vtanh.pop %v487
        %v504 = vtanh.pop %v488
        %v505 = vtanh.pop %v489
        %v506 = vtanh.pop %v490
        %v507 = vtanh.pop %v491
        %v508 = vtanh.pop %v492
        %v509 = vtanh.pop %v493
        %v510 = vmul.f32 %v494, 0.5
        %v511 = vmul.f32 %v495, 0.5
        %v512 = vmul.f32 %v496, 0.5
        %v513 = vmul.f32 %v497, 0.5
        %v514 = vmul.f32 %v498, 0.5
        %v515 = vmul.f32 %v499, 0.5
        %v516 = vmul.f32 %v500, 0.5
        %v517 = vmul.f32 %v501, 0.5
        %v518 = vmul.f32 %v502, 0.5
        %v519 = vmul.f32 %v503, 0.5
        %v520 = vmul.f32 %v504, 0.5
        %v521 = vmul.f32 %v505, 0.5
        %v522 = vmul.f32 %v506, 0.5
        %v523 = vmul.f32 %v507, 0.5
        %v524 = vmul.f32 %v508, 0.5
        %v525 = vmul.f32 %v509, 0.5
        %v526 = vadd.f32 %v510, 0.5
        %v527 = vadd.f32 %v511, 0.5
        %v528 = vadd.f32 %v512, 0.5
        %v529 = vadd.f32 %v513, 0.5
        %v530 = vadd.f32 %v514, 0.5
        %v531 = vadd.f32 %v515, 0.5
        %v532 = vadd.f32 %v516, 0.5
        %v533 = vadd.f32 %v517, 0.5
        %v534 = vadd.f32 %v518, 0.5
        %v535 = vadd.f32 %v519, 0.5
        %v536 = vadd.f32 %v520, 0.5
        %v537 = vadd.f32 %v521, 0.5
        %v538 = vadd.f32 %v522, 0.5
        %v539 = vadd.f32 %v523, 0.5
        %v540 = vadd.f32 %v524, 0.5
        %v541 = vadd.f32 %v525, 0.5
        %v542 = vpack.c.bf16 %v526, %v526
        %v543 = vpack.c.bf16 %v527, %v527
        %v544 = vpack.c.bf16 %v528, %v528
        %v545 = vpack.c.bf16 %v529, %v529
        %v546 = vpack.c.bf16 %v530, %v530
        %v547 = vpack.c.bf16 %v531, %v531
        %v548 = vpack.c.bf16 %v532, %v532
        %v549 = vpack.c.bf16 %v533, %v533
        %v550 = vpack.c.bf16 %v534, %v534
        %v551 = vpack.c.bf16 %v535, %v535
        %v552 = vpack.c.bf16 %v536, %v536
        %v553 = vpack.c.bf16 %v537, %v537
        %v554 = vpack.c.bf16 %v538, %v538
        %v555 = vpack.c.bf16 %v539, %v539
        %v556 = vpack.c.bf16 %v540, %v540
        %v557 = vpack.c.bf16 %v541, %v541
        %558 = vst [vmem:[%s218] sm:$0xf] %v542
        %559 = vst [vmem:[%s218 + $0x4] sm:$0xf] %v543
        %560 = vst [vmem:[%s218 + $0x8] sm:$0xf] %v544
        %561 = vst [vmem:[%s218 + $0xc] sm:$0xf] %v545
        %562 = vst [vmem:[%s218 + $0x10] sm:$0xf] %v546
        %563 = vst [vmem:[%s218 + $0x14] sm:$0xf] %v547
        %564 = vst [vmem:[%s218 + $0x18] sm:$0xf] %v548
        %565 = vst [vmem:[%s218 + $0x1c] sm:$0xf] %v549
        %566 = vst [vmem:[%s218 + $0x20] sm:$0xf] %v550
        %567 = vst [vmem:[%s218 + $0x24] sm:$0xf] %v551
        %568 = vst [vmem:[%s218 + $0x28] sm:$0xf] %v552
        %569 = vst [vmem:[%s218 + $0x2c] sm:$0xf] %v553
        %570 = vst [vmem:[%s218 + $0x30] sm:$0xf] %v554
        %571 = vst [vmem:[%s218 + $0x34] sm:$0xf] %v555
        %572 = vst [vmem:[%s218 + $0x38] sm:$0xf] %v556
        %573 = vst [vmem:[%s218 + $0x3c] sm:$0xf] %v557
        %s574 = sand.u32 %s137, 1
        %s575 = scalar_lea.sflag [#allocation3], %s574
        %s576 = sand.u32 %s137, 1
        %s577 = smul.addr %s576, 64
        %s578 = scalar_lea.vmem [#allocation2], %s577
        // Predicated region
        $region41: #{tpu_custom_call.1} parent=39 // pred_check
          %p579 = pneg %p147
        $region42: #{tpu_custom_call.1} parent=39 // pred_check_branch
          %581 = sbr.rel (%p579) target = $region44
        $region43: #{tpu_custom_call.1} parent=39 // pred_region
          %s582 = smul.u32 16, %s19
          %584 = vsyncadd %s575, 0
          %s585 = smul.addr %s582, 4
          %s586 = scalar_lea.hbm %s5, %s585
          %s587 = sshll.u32 %s578, 4
          %s588 = int_to_ptr.vmem [resolvable:$true] %s587
          %s589 = sshll.u32 %s586, 4
          %s590 = int_to_ptr.hbm [resolvable:$true] %s589
          %595 = dma.vmem_to_hbm [thread:$0]  %s588, 1024, %s590, %s575, 64, 64, 4
        $region44: #{tpu_custom_call.1} parent=39 // pred_fallthru
          _
      $region40: #{tpu_custom_call.1} parent=5 // pred_fallthru
        _
      %p596 = scmp.le.s32.totalorder 2, %s14
      // Predicated region
      $region45: #{tpu_custom_call.1} parent=5 // pred_check
        %p597 = pneg %p596
      $region46: #{tpu_custom_call.1} parent=5 // pred_check_branch
        %599 = sbr.rel (%p597) target = $region48
      $region47: #{tpu_custom_call.1} parent=5 // pred_region
        %s600 = ssub.s32 %s14, 2
        // Predicated region
        $region49: #{tpu_custom_call.1} parent=47 // pred_check
          %p601 = pneg %p153
        $region50: #{tpu_custom_call.1} parent=47 // pred_check_branch
          %603 = sbr.rel (%p601) target = $region52
        $region51: #{tpu_custom_call.1} parent=47 // pred_region
          %s604 = sand.u32 %s138, 1
          %s605 = scalar_lea.sflag [#allocation3], %s604
          %s606 = sand.u32 %s138, 1
          %s607 = smul.addr %s606, 64
          %s608 = scalar_lea.vmem [#allocation2], %s607
          %610 = dma.done %s605, 1024
        $region52: #{tpu_custom_call.1} parent=47 // pred_fallthru
          _
      $region48: #{tpu_custom_call.1} parent=5 // pred_fallthru
        _
    $region6: #{tpu_custom_call.1} parent=1 // loop_footer
      %s18 = sadd.s32 1, %s14
    $region7: #{tpu_custom_call.1} parent=1 // loop_footer_branch
      %13 = sbr.rel target = $region3
    $region8: #{tpu_custom_call.1} parent=1 // loop_exit
      _
    %611 = vsyncpa [#allocation3], 1
    %s612 = scalar_lea.sflag [#allocation3], 1
    %613 = vsyncpa %s612, 1

</llo_original>
